<compile_context>
chip_gen: v7x
topology: tpu7x:2x2x1
jax: 0.10.0
libtpu: 0.0.40
codegen_flags: <defaults>
</compile_context>

<pallas_src>
import functools

import jax
import jax.numpy as jnp
from jax import lax
from jax.experimental import pallas as pl
from jax.experimental.pallas import tpu as pltpu


def _round_up(n, m):
    return ((n + m - 1) // m) * m


def _leaky_relu(x, slope=0.2):
    return jnp.where(x > 0, x, slope * x)


def _hash_bits(shape, key_u32):
    """Counter-based uint32 random bits (murmur3 finalizer). VPU-only, portable."""
    rows = lax.broadcasted_iota(jnp.int32, shape, 0)
    cols = lax.broadcasted_iota(jnp.int32, shape, 1)
    v = (rows * shape[1] + cols).astype(jnp.uint32) + key_u32
    v = v ^ (v >> 16)
    v = v * jnp.uint32(0x85EBCA6B)
    v = v ^ (v >> 13)
    v = v * jnp.uint32(0xC2B2AE35)
    v = v ^ (v >> 16)
    return v


def _frame_disc_kernel(seed_ref,
                       x_ref,
                       w1_ref, b1_ref,
                       w2_ref, b2_ref,
                       w3_ref, b3_ref,
                       w4_ref, b4_ref,
                       out_ref,
                       *, p_drop):
    tile = pl.program_id(0)
    # Mix the grid position into the key so every batch tile gets a distinct mask.
    key = (seed_ref[0].astype(jnp.uint32) * jnp.uint32(0x9E3779B9)
           + tile.astype(jnp.uint32) * jnp.uint32(0x7F4A7C15))
    thresh = jnp.uint32(min(int(round(p_drop * 2.0 ** 32)), 2 ** 32 - 1))

    def dropout(h, salt):
        if p_drop <= 0.0:
            return h
        bits = _hash_bits(h.shape, key + jnp.uint32(salt))
        # Keep-prob rescale 1/(1-p) is folded into the next layer's weights (host side).
        return jnp.where(bits >= thresh, h, 0.0)

    x = x_ref[...]  # bf16, lane-padded feature dim

    # fc1 -> leaky_relu(0.2) -> dropout(0.3)
    h = jnp.dot(x, w1_ref[...], preferred_element_type=jnp.float32) + b1_ref[...]
    h = dropout(_leaky_relu(h), 0x1001)

    # fc2 -> leaky_relu(0.2) -> dropout(0.3)
    h = jnp.dot(h.astype(jnp.bfloat16), w2_ref[...],
                preferred_element_type=jnp.float32) + b2_ref[...]
    h = dropout(_leaky_relu(h), 0x2002)

    # fc3 -> leaky_relu(0.2) -> dropout(0.3)
    h = jnp.dot(h.astype(jnp.bfloat16), w3_ref[...],
                preferred_element_type=jnp.float32) + b3_ref[...]
    h = dropout(_leaky_relu(h), 0x3003)

    # fc4 (out_dim == 1): VPU multiply + lane reduction instead of an N=1 MXU matmul.
    logits = jnp.sum(h * w4_ref[...], axis=-1, keepdims=True) + b4_ref[...]
    out_ref[...] = jax.nn.sigmoid(logits)


def frame_discriminator_forward(x, params, seed, p_drop=0.3):
    """Training-mode forward (dropout always active, matching F.dropout defaults)."""
    B, F = x.shape
    d1 = params["w1"].shape[1]
    d2 = params["w2"].shape[1]
    d3 = params["w3"].shape[1]

    # Lane-align the feature axis and sublane-align / tile the batch axis.
    Fp = _round_up(F, 128)
    TB = min(128, _round_up(B, 8))
    Bp = _round_up(B, TB)

    x_p = jnp.zeros((Bp, Fp), jnp.bfloat16).at[:B, :F].set(x.astype(jnp.bfloat16))

    inv_keep = 1.0 / (1.0 - p_drop) if p_drop > 0.0 else 1.0
    # bf16 weights; dropout rescale folded into the *following* layer's weights.
    w1 = jnp.zeros((Fp, d1), jnp.bfloat16).at[:F, :].set(params["w1"].astype(jnp.bfloat16))
    w2 = (params["w2"] * inv_keep).astype(jnp.bfloat16)
    w3 = (params["w3"] * inv_keep).astype(jnp.bfloat16)
    w4 = (params["w4"].reshape(1, d3) * inv_keep).astype(jnp.float32)  # row vector, f32
    b1 = params["b1"].astype(jnp.float32)
    b2 = params["b2"].astype(jnp.float32)
    b3 = params["b3"].astype(jnp.float32)
    b4 = params["b4"].astype(jnp.float32)

    seed_arr = jnp.asarray([seed], dtype=jnp.int32)
    kernel = functools.partial(_frame_disc_kernel, p_drop=float(p_drop))

    const = lambda i, seed: (0, 0)   # weights/biases: VMEM-resident across batch tiles
    batch = lambda i, seed: (i, 0)

    out = pl.pallas_call(
        kernel,
        out_shape=jax.ShapeDtypeStruct((Bp, 1), jnp.float32),
        grid_spec=pltpu.PrefetchScalarGridSpec(
            num_scalar_prefetch=1,
            grid=(Bp // TB,),
            in_specs=[
                pl.BlockSpec((TB, Fp), batch),   # x
                pl.BlockSpec((Fp, d1), const),   # w1
                pl.BlockSpec((1, d1), const),    # b1
                pl.BlockSpec((d1, d2), const),   # w2
                pl.BlockSpec((1, d2), const),    # b2
                pl.BlockSpec((d2, d3), const),   # w3
                pl.BlockSpec((1, d3), const),    # b3
                pl.BlockSpec((1, d3), const),    # w4 (row)
                pl.BlockSpec((1, 1), const),     # b4
            ],
            out_specs=pl.BlockSpec((TB, 1), batch),
        ),
        compiler_params=pltpu.CompilerParams(
            dimension_semantics=("parallel",),
            vmem_limit_bytes=32 * 1024 * 1024,
        ),
    )(seed_arr, x_p, w1, b1, w2, b2, w3, b3, w4, b4)
    return out[:B]


def _reference_forward_nodrop(x, params):
    """Pure-JAX reference (no dropout) using the same bf16 weight casts as the kernel."""
    def mm_bf16(h, w, b):
        return jnp.dot(h.astype(jnp.bfloat16), w.astype(jnp.bfloat16),
                       preferred_element_type=jnp.float32) + b
    h = _leaky_relu(mm_bf16(x, params["w1"], params["b1"]))
    h = _leaky_relu(mm_bf16(h, params["w2"], params["b2"]))
    h = _leaky_relu(mm_bf16(h, params["w3"], params["b3"]))
    logits = jnp.dot(h, params["w4"].astype(jnp.float32)) + params["b4"]
    return jax.nn.sigmoid(logits)


def init_params(key, feature_dim=58, latent_dim=128, output_dim=1):
    """nn.Linear-style init; weights stored transposed as (in_dim, out_dim)."""
    dims = [(feature_dim, latent_dim),
            (latent_dim, latent_dim * 2),
            (latent_dim * 2, latent_dim * 4),
            (latent_dim * 4, output_dim)]
    params = {}
    for i, (fan_in, fan_out) in enumerate(dims, start=1):
        key, kw, kb = jax.random.split(key, 3)
        bound = 1.0 / jnp.sqrt(jnp.float32(fan_in))
        params[f"w{i}"] = jax.random.uniform(kw, (fan_in, fan_out), jnp.float32, -bound, bound)
        params[f"b{i}"] = jax.random.uniform(kb, (1, fan_out), jnp.float32, -bound, bound)
    return params


if __name__ == "__main__":
    key = jax.random.PRNGKey(0)
    B, feature_dim, latent_dim, output_dim = 8, 58, 128, 1

    key, kx = jax.random.split(key)
    x = jax.random.normal(kx, (B, feature_dim), jnp.float32)
    params = init_params(key, feature_dim, latent_dim, output_dim)

    # Numerics check with dropout disabled against a pure-JAX reference.
    out_nodrop = jax.block_until_ready(
        frame_discriminator_forward(x, params, seed=0, p_drop=0.0))
    ref = _reference_forward_nodrop(x, params)
    assert out_nodrop.shape == (B, output_dim)
    assert bool(jnp.all(jnp.abs(out_nodrop - ref) < 1e-2))

    # Training-mode forward (dropout p=0.3), matching the PyTorch module.
    # TODO(synk): torch's exact RNG stream is not reproducible; dropout masks come from a
    # counter-based hash PRNG keyed on (seed, grid tile).
    out = jax.block_until_ready(
        frame_discriminator_forward(x, params, seed=1234, p_drop=0.3))
    assert out.shape == (B, output_dim)
    assert bool(jnp.all((out >= 0.0) & (out <= 1.0)))
    print("KERNEL_OK")
</pallas_src>

<mosaic_0001>
module attributes {stable_mosaic.version = 11 : i64} {
  func.func @_frame_disc_kernel(%arg0: i32, %arg1: memref<1xi32, #tpu.memory_space<smem>>, %arg2: memref<8x128xbf16, #tpu.memory_space<vmem>>, %arg3: memref<128x128xbf16, #tpu.memory_space<vmem>>, %arg4: memref<1x128xf32, #tpu.memory_space<vmem>>, %arg5: memref<128x256xbf16, #tpu.memory_space<vmem>>, %arg6: memref<1x256xf32, #tpu.memory_space<vmem>>, %arg7: memref<256x512xbf16, #tpu.memory_space<vmem>>, %arg8: memref<1x512xf32, #tpu.memory_space<vmem>>, %arg9: memref<1x512xf32, #tpu.memory_space<vmem>>, %arg10: memref<1x1xf32, #tpu.memory_space<vmem>>, %arg11: memref<8x1xf32, #tpu.memory_space<vmem>>) attributes {dimension_semantics = [#tpu.dimension_semantics<parallel>], iteration_bounds = array<i64: 1>, scalar_prefetch = 1 : i64, scratch_operands = 0 : i64, tpu.core_type = #tpu.core_type<tc>, window_params = [{transform_indices = @transform_0, window_bounds = array<i64: 8, 128>}, {pipeline_mode = #tpu.pipeline_mode<synchronous>, transform_indices = @transform_1, window_bounds = array<i64: 128, 128>}, {pipeline_mode = #tpu.pipeline_mode<synchronous>, transform_indices = @transform_2, window_bounds = array<i64: 1, 128>}, {pipeline_mode = #tpu.pipeline_mode<synchronous>, transform_indices = @transform_3, window_bounds = array<i64: 128, 256>}, {pipeline_mode = #tpu.pipeline_mode<synchronous>, transform_indices = @transform_4, window_bounds = array<i64: 1, 256>}, {pipeline_mode = #tpu.pipeline_mode<synchronous>, transform_indices = @transform_5, window_bounds = array<i64: 256, 512>}, {pipeline_mode = #tpu.pipeline_mode<synchronous>, transform_indices = @transform_6, window_bounds = array<i64: 1, 512>}, {pipeline_mode = #tpu.pipeline_mode<synchronous>, transform_indices = @transform_7, window_bounds = array<i64: 1, 512>}, {pipeline_mode = #tpu.pipeline_mode<synchronous>, transform_indices = @transform_8, window_bounds = array<i64: 1, 1>}, {transform_indices = @transform_9, window_bounds = array<i64: 8, 1>}]} {
    %c0 = arith.constant 0 : index
    %c0_0 = arith.constant 0 : index
    %0 = vector.load %arg2[%c0, %c0_0] : memref<8x128xbf16, #tpu.memory_space<vmem>>, vector<8x128xbf16>
    %c0_1 = arith.constant 0 : index
    %c0_2 = arith.constant 0 : index
    %1 = vector.load %arg3[%c0_1, %c0_2] : memref<128x128xbf16, #tpu.memory_space<vmem>>, vector<128x128xbf16>
    %cst = arith.constant dense<0.000000e+00> : vector<8x128xf32>
    %2 = tpu.matmul %0, %1, %cst {dimension_numbers = #tpu.dot_dimension_numbers<[1], [0], [0], [1], [0, 0, 1, 1], [], []>} : vector<8x128xbf16>, vector<128x128xbf16>, vector<8x128xf32> -> vector<8x128xf32>
    %c0_3 = arith.constant 0 : index
    %c0_4 = arith.constant 0 : index
    %3 = vector.load %arg4[%c0_3, %c0_4] : memref<1x128xf32, #tpu.memory_space<vmem>>, vector<1x128xf32>
    %4 = vector.broadcast %3 : vector<1x128xf32> to vector<8x128xf32>
    %5 = arith.addf %2, %4 : vector<8x128xf32>
    %cst_5 = arith.constant 0.000000e+00 : f32
    %6 = vector.broadcast %cst_5 : f32 to vector<8x128xf32>
    %7 = arith.cmpf ogt, %5, %6 : vector<8x128xf32>
    %cst_6 = arith.constant 2.000000e-01 : f32
    %8 = vector.broadcast %cst_6 : f32 to vector<8x128xf32>
    %9 = arith.mulf %8, %5 : vector<8x128xf32>
    %10 = arith.select %7, %5, %9 : vector<8x128xi1>, vector<8x128xf32>
    %11 = arith.truncf %10 : vector<8x128xf32> to vector<8x128xbf16>
    %c0_7 = arith.constant 0 : index
    %c0_8 = arith.constant 0 : index
    %12 = vector.load %arg5[%c0_7, %c0_8] : memref<128x256xbf16, #tpu.memory_space<vmem>>, vector<128x256xbf16>
    %cst_9 = arith.constant dense<0.000000e+00> : vector<8x256xf32>
    %13 = tpu.matmul %11, %12, %cst_9 {dimension_numbers = #tpu.dot_dimension_numbers<[1], [0], [0], [1], [0, 0, 1, 1], [], []>} : vector<8x128xbf16>, vector<128x256xbf16>, vector<8x256xf32> -> vector<8x256xf32>
    %c0_10 = arith.constant 0 : index
    %c0_11 = arith.constant 0 : index
    %14 = vector.load %arg6[%c0_10, %c0_11] : memref<1x256xf32, #tpu.memory_space<vmem>>, vector<1x256xf32>
    %15 = vector.broadcast %14 : vector<1x256xf32> to vector<8x256xf32>
    %16 = arith.addf %13, %15 : vector<8x256xf32>
    %cst_12 = arith.constant 0.000000e+00 : f32
    %17 = vector.broadcast %cst_12 : f32 to vector<8x256xf32>
    %18 = arith.cmpf ogt, %16, %17 : vector<8x256xf32>
    %cst_13 = arith.constant 2.000000e-01 : f32
    %19 = vector.broadcast %cst_13 : f32 to vector<8x256xf32>
    %20 = arith.mulf %19, %16 : vector<8x256xf32>
    %21 = arith.select %18, %16, %20 : vector<8x256xi1>, vector<8x256xf32>
    %22 = arith.truncf %21 : vector<8x256xf32> to vector<8x256xbf16>
    %c0_14 = arith.constant 0 : index
    %c0_15 = arith.constant 0 : index
    %23 = vector.load %arg7[%c0_14, %c0_15] : memref<256x512xbf16, #tpu.memory_space<vmem>>, vector<256x512xbf16>
    %cst_16 = arith.constant dense<0.000000e+00> : vector<8x512xf32>
    %24 = tpu.matmul %22, %23, %cst_16 {dimension_numbers = #tpu.dot_dimension_numbers<[1], [0], [0], [1], [0, 0, 1, 1], [], []>} : vector<8x256xbf16>, vector<256x512xbf16>, vector<8x512xf32> -> vector<8x512xf32>
    %c0_17 = arith.constant 0 : index
    %c0_18 = arith.constant 0 : index
    %25 = vector.load %arg8[%c0_17, %c0_18] : memref<1x512xf32, #tpu.memory_space<vmem>>, vector<1x512xf32>
    %26 = vector.broadcast %25 : vector<1x512xf32> to vector<8x512xf32>
    %27 = arith.addf %24, %26 : vector<8x512xf32>
    %cst_19 = arith.constant 0.000000e+00 : f32
    %28 = vector.broadcast %cst_19 : f32 to vector<8x512xf32>
    %29 = arith.cmpf ogt, %27, %28 : vector<8x512xf32>
    %cst_20 = arith.constant 2.000000e-01 : f32
    %30 = vector.broadcast %cst_20 : f32 to vector<8x512xf32>
    %31 = arith.mulf %30, %27 : vector<8x512xf32>
    %32 = arith.select %29, %27, %31 : vector<8x512xi1>, vector<8x512xf32>
    %c0_21 = arith.constant 0 : index
    %c0_22 = arith.constant 0 : index
    %33 = vector.load %arg9[%c0_21, %c0_22] : memref<1x512xf32, #tpu.memory_space<vmem>>, vector<1x512xf32>
    %34 = vector.broadcast %33 : vector<1x512xf32> to vector<8x512xf32>
    %35 = arith.mulf %32, %34 : vector<8x512xf32>
    %cst_23 = arith.constant dense<0.000000e+00> : vector<8xf32>
    %36 = vector.multi_reduction <add>, %35, %cst_23 [1] : vector<8x512xf32> to vector<8xf32>
    %37 = vector.shape_cast %36 : vector<8xf32> to vector<8x1xf32>
    %c0_24 = arith.constant 0 : index
    %c0_25 = arith.constant 0 : index
    %38 = vector.load %arg10[%c0_24, %c0_25] : memref<1x1xf32, #tpu.memory_space<vmem>>, vector<1x1xf32>
    %39 = vector.broadcast %38 : vector<1x1xf32> to vector<8x1xf32>
    %40 = arith.addf %37, %39 : vector<8x1xf32>
    %41 = arith.negf %40 : vector<8x1xf32>
    %42 = math.exp %41 : vector<8x1xf32>
    %cst_26 = arith.constant 1.000000e+00 : f32
    %43 = vector.broadcast %cst_26 : f32 to vector<8x1xf32>
    %44 = arith.addf %43, %42 : vector<8x1xf32>
    %45 = arith.divf %43, %44 : vector<8x1xf32>
    %c0_27 = arith.constant 0 : index
    %c0_28 = arith.constant 0 : index
    %46 = vector.load %arg11[%c0_27, %c0_28] : memref<8x1xf32, #tpu.memory_space<vmem>>, vector<8x1xf32>
    tpu.vector_store %arg11[%c0_27, %c0_28], %45 {strides = array<i32>} : memref<8x1xf32, #tpu.memory_space<vmem>>, vector<8x1xf32>,
    return
  }
  func.func @transform_0(%arg0: i32, %arg1: memref<1xi32, #tpu.memory_space<smem>>) -> (i32, i32) {
    %c0_i32 = arith.constant 0 : i32
    %c0_i32_0 = arith.constant 0 : i32
    return %arg0, %c0_i32 : i32, i32
  }
  func.func @transform_1(%arg0: i32, %arg1: memref<1xi32, #tpu.memory_space<smem>>) -> (i32, i32) {
    %c0_i32 = arith.constant 0 : i32
    %c0_i32_0 = arith.constant 0 : i32
    %c0_i32_1 = arith.constant 0 : i32
    return %c0_i32, %c0_i32_0 : i32, i32
  }
  func.func @transform_2(%arg0: i32, %arg1: memref<1xi32, #tpu.memory_space<smem>>) -> (i32, i32) {
    %c0_i32 = arith.constant 0 : i32
    %c0_i32_0 = arith.constant 0 : i32
    %c0_i32_1 = arith.constant 0 : i32
    return %c0_i32, %c0_i32_0 : i32, i32
  }
  func.func @transform_3(%arg0: i32, %arg1: memref<1xi32, #tpu.memory_space<smem>>) -> (i32, i32) {
    %c0_i32 = arith.constant 0 : i32
    %c0_i32_0 = arith.constant 0 : i32
    %c0_i32_1 = arith.constant 0 : i32
    return %c0_i32, %c0_i32_0 : i32, i32
  }
  func.func @transform_4(%arg0: i32, %arg1: memref<1xi32, #tpu.memory_space<smem>>) -> (i32, i32) {
    %c0_i32 = arith.constant 0 : i32
    %c0_i32_0 = arith.constant 0 : i32
    %c0_i32_1 = arith.constant 0 : i32
    return %c0_i32, %c0_i32_0 : i32, i32
  }
  func.func @transform_5(%arg0: i32, %arg1: memref<1xi32, #tpu.memory_space<smem>>) -> (i32, i32) {
    %c0_i32 = arith.constant 0 : i32
    %c0_i32_0 = arith.constant 0 : i32
    %c0_i32_1 = arith.constant 0 : i32
    return %c0_i32, %c0_i32_0 : i32, i32
  }
  func.func @transform_6(%arg0: i32, %arg1: memref<1xi32, #tpu.memory_space<smem>>) -> (i32, i32) {
    %c0_i32 = arith.constant 0 : i32
    %c0_i32_0 = arith.constant 0 : i32
    %c0_i32_1 = arith.constant 0 : i32
    return %c0_i32, %c0_i32_0 : i32, i32
  }
  func.func @transform_7(%arg0: i32, %arg1: memref<1xi32, #tpu.memory_space<smem>>) -> (i32, i32) {
    %c0_i32 = arith.constant 0 : i32
    %c0_i32_0 = arith.constant 0 : i32
    %c0_i32_1 = arith.constant 0 : i32
    return %c0_i32, %c0_i32_0 : i32, i32
  }
  func.func @transform_8(%arg0: i32, %arg1: memref<1xi32, #tpu.memory_space<smem>>) -> (i32, i32) {
    %c0_i32 = arith.constant 0 : i32
    %c0_i32_0 = arith.constant 0 : i32
    %c0_i32_1 = arith.constant 0 : i32
    return %c0_i32, %c0_i32_0 : i32, i32
  }
  func.func @transform_9(%arg0: i32, %arg1: memref<1xi32, #tpu.memory_space<smem>>) -> (i32, i32) {
    %c0_i32 = arith.constant 0 : i32
    %c0_i32_0 = arith.constant 0 : i32
    return %arg0, %c0_i32 : i32, i32
  }
}

</mosaic_0001>

<llo_original>
// kernel: tpu_custom_call.1
$region0: #{tpu_custom_call.1}
  #allocation0 [shape = 'u32[]', space=smem, size = 0x4, offset = 0x4, fixed_abs, tag = 'smem constant byte address 0x4 - core index']
  #allocation1 [shape = 'u32[144,128]{1,0:T(1,128)}', space=vmem, size = 0x12000, scoped, tag = 'internal scratch']
  #allocation2 [shape = 's32[1]{0}', space=sflag, size = 0x4, scoped, tag = 'scoped memory for tpu_custom_call.1']
  #allocation3 [shape = 's32[1]{0:T(128)S(6)}', space=smem, size = 0x200, scoped, tag = 'prefetched SMEM operand 0']
  #allocation4 [shape = 'f32[1,1]{1,0:T(1,128)S(1)}', space=vmem, size = 0x200, scoped, tag = 'scoped memory for tpu_custom_call.1']
  %s0 = inlined_call_operand.<no memory space> [shape: s32[1], index: 0, kind: input, shape index: {}]
  %s1 = inlined_call_operand.vmem [shape: bf16[8,128], index: 1, kind: input, shape index: {}]
  %s2 = inlined_call_operand.hbm [shape: bf16[128,128], index: 2, kind: input, shape index: {}]
  %s3 = inlined_call_operand.vmem [shape: f32[1,128], index: 3, kind: input, shape index: {}]
  %s4 = inlined_call_operand.hbm [shape: bf16[128,256], index: 4, kind: input, shape index: {}]
  %s5 = inlined_call_operand.vmem [shape: f32[1,256], index: 5, kind: input, shape index: {}]
  %s6 = inlined_call_operand.hbm [shape: bf16[256,512], index: 6, kind: input, shape index: {}]
  %s7 = inlined_call_operand.vmem [shape: f32[1,512], index: 7, kind: input, shape index: {}]
  %s8 = inlined_call_operand.vmem [shape: f32[1,512], index: 8, kind: input, shape index: {}]
  %s9 = inlined_call_operand.<no memory space> [shape: f32[1,1], index: 9, kind: input, shape index: {}]
  %s10 = inlined_call_operand.vmem [shape: f32[8,1], index: 10, kind: output, shape index: {}]
  %s11 = sld [smem:[#allocation0]]
  $region58: #{tpu_custom_call.1} parent=0
    _
  %s13 = ssub.s32 1, %s11
  %s14 = scalar_select 0, %s13, %s11
  %15 = sst [smem:[#allocation3]] %s0
  %v16 = vstv %s9
  %17 = vst [vmem:[#allocation4] sm:$0x1] %v16
  $region1: #{tpu_custom_call.1} parent=0
    #allocation5 [shape = 'u8[32768]{0}', space=vmem, size = 0x8000, scoped, tag = 'input window, operand 2, single buffered']
    #allocation6 [shape = 's32[1]{0}', space=sflag, size = 0x4, scoped, tag = 'scoped memory for tpu_custom_call.1']
    #allocation7 [shape = 'u8[65536]{0}', space=vmem, size = 0x10000, scoped, tag = 'input window, operand 4, single buffered']
    #allocation8 [shape = 's32[1]{0}', space=sflag, size = 0x4, scoped, tag = 'scoped memory for tpu_custom_call.1']
    #allocation9 [shape = 'u8[262144]{0}', space=vmem, size = 0x40000, scoped, tag = 'input window, operand 6, single buffered']
    %18 = vsyncpa [#allocation6], 0
    %19 = vsyncpa [#allocation8], 0
    // Predicated region
    $region2: #{tpu_custom_call.1} parent=1 // pred_check
      _
    $region3: #{tpu_custom_call.1} parent=1 // pred_check_branch
      %21 = sbr.rel (0) target = $region5
    $region4: #{tpu_custom_call.1} parent=1 // pred_region
      _
    $region5: #{tpu_custom_call.1} parent=1 // pred_fallthru
      _
    // Predicated region
    $region6: #{tpu_custom_call.1} parent=1 // pred_check
      _
    $region7: #{tpu_custom_call.1} parent=1 // pred_check_branch
      %23 = sbr.rel (0) target = $region9
    $region8: #{tpu_custom_call.1} parent=1 // pred_region
      %s25 = ssub.s32 1024, 1024
      %26 = vsyncadd [#allocation6], %s25
      %s27 = sshll.u32 [#allocation5], 4
      %s28 = int_to_ptr.vmem [resolvable:$true] %s27
      %33 = dma.hbm_to_vmem [thread:$0]  %s2, 1024, %s28, [#allocation6], 64, 64, 4
    $region9: #{tpu_custom_call.1} parent=1 // pred_fallthru
      _
    // Predicated region
    $region10: #{tpu_custom_call.1} parent=1 // pred_check
      _
    $region11: #{tpu_custom_call.1} parent=1 // pred_check_branch
      %35 = sbr.rel (0) target = $region13
    $region12: #{tpu_custom_call.1} parent=1 // pred_region
      _
    $region13: #{tpu_custom_call.1} parent=1 // pred_fallthru
      _
    // Predicated region
    $region14: #{tpu_custom_call.1} parent=1 // pred_check
      _
    $region15: #{tpu_custom_call.1} parent=1 // pred_check_branch
      %37 = sbr.rel (0) target = $region17
    $region16: #{tpu_custom_call.1} parent=1 // pred_region
      %s39 = ssub.s32 2048, 2048
      %40 = vsyncadd [#allocation8], %s39
      %s41 = sshll.u32 [#allocation7], 4
      %s42 = int_to_ptr.vmem [resolvable:$true] %s41
      %47 = dma.hbm_to_vmem [thread:$0]  %s4, 2048, %s42, [#allocation8], 128, 128, 8
    $region17: #{tpu_custom_call.1} parent=1 // pred_fallthru
      _
    // Predicated region
    $region18: #{tpu_custom_call.1} parent=1 // pred_check
      _
    $region19: #{tpu_custom_call.1} parent=1 // pred_check_branch
      %49 = sbr.rel (0) target = $region21
    $region20: #{tpu_custom_call.1} parent=1 // pred_region
      _
    $region21: #{tpu_custom_call.1} parent=1 // pred_fallthru
      _
    // Predicated region
    $region22: #{tpu_custom_call.1} parent=1 // pred_check
      _
    $region23: #{tpu_custom_call.1} parent=1 // pred_check_branch
      %51 = sbr.rel (0) target = $region25
    $region24: #{tpu_custom_call.1} parent=1 // pred_region
      %s53 = ssub.s32 8192, 8192
      %54 = vsyncadd [#allocation8], %s53
      %s55 = sshll.u32 [#allocation9], 4
      %s56 = int_to_ptr.vmem [resolvable:$true] %s55
      %61 = dma.hbm_to_vmem [thread:$0]  %s6, 8192, %s56, [#allocation8], 256, 256, 16
    $region25: #{tpu_custom_call.1} parent=1 // pred_fallthru
      _
    // Predicated region
    $region26: #{tpu_custom_call.1} parent=1 // pred_check
      _
    $region27: #{tpu_custom_call.1} parent=1 // pred_check_branch
      %63 = sbr.rel (0) target = $region29
    $region28: #{tpu_custom_call.1} parent=1 // pred_region
      _
    $region29: #{tpu_custom_call.1} parent=1 // pred_fallthru
      _
    // Predicated region
    $region30: #{tpu_custom_call.1} parent=1 // pred_check
      _
    $region31: #{tpu_custom_call.1} parent=1 // pred_check_branch
      %65 = sbr.rel (0) target = $region33
    $region32: #{tpu_custom_call.1} parent=1 // pred_region
      _
    $region33: #{tpu_custom_call.1} parent=1 // pred_fallthru
      _
    // Predicated region
    $region34: #{tpu_custom_call.1} parent=1 // pred_check
      _
    $region35: #{tpu_custom_call.1} parent=1 // pred_check_branch
      %67 = sbr.rel (0) target = $region37
    $region36: #{tpu_custom_call.1} parent=1 // pred_region
      _
    $region37: #{tpu_custom_call.1} parent=1 // pred_fallthru
      _
    // Predicated region
    $region38: #{tpu_custom_call.1} parent=1 // pred_check
      _
    $region39: #{tpu_custom_call.1} parent=1 // pred_check_branch
      %69 = sbr.rel (0) target = $region41
    $region40: #{tpu_custom_call.1} parent=1 // pred_region
      %70 = dma.done [#allocation6], 1024
    $region41: #{tpu_custom_call.1} parent=1 // pred_fallthru
      _
    // Predicated region
    $region42: #{tpu_custom_call.1} parent=1 // pred_check
      _
    $region43: #{tpu_custom_call.1} parent=1 // pred_check_branch
      %72 = sbr.rel (0) target = $region45
    $region44: #{tpu_custom_call.1} parent=1 // pred_region
      %73 = dma.done [#allocation8], 2048
    $region45: #{tpu_custom_call.1} parent=1 // pred_fallthru
      _
    // Predicated region
    $region46: #{tpu_custom_call.1} parent=1 // pred_check
      _
    $region47: #{tpu_custom_call.1} parent=1 // pred_check_branch
      %75 = sbr.rel (0) target = $region49
    $region48: #{tpu_custom_call.1} parent=1 // pred_region
      %76 = dma.done [#allocation8], 8192
    $region49: #{tpu_custom_call.1} parent=1 // pred_fallthru
      _
    %v78 = vld [vmem:[%s1] sm:$0xf]
    %v79 = vld [vmem:[#allocation5] sm:$0xf]
    %v80 = vld [vmem:[#allocation5 + $0x4] sm:$0xf]
    %v81 = vld [vmem:[#allocation5 + $0x8] sm:$0xf]
    %v82 = vld [vmem:[#allocation5 + $0xc] sm:$0xf]
    %v83 = vld [vmem:[#allocation5 + $0x10] sm:$0xf]
    %v84 = vld [vmem:[#allocation5 + $0x14] sm:$0xf]
    %v85 = vld [vmem:[#allocation5 + $0x18] sm:$0xf]
    %v86 = vld [vmem:[#allocation5 + $0x1c] sm:$0xf]
    %v87 = vld [vmem:[#allocation5 + $0x20] sm:$0xf]
    %v88 = vld [vmem:[#allocation5 + $0x24] sm:$0xf]
    %v89 = vld [vmem:[#allocation5 + $0x28] sm:$0xf]
    %v90 = vld [vmem:[#allocation5 + $0x2c] sm:$0xf]
    %v91 = vld [vmem:[#allocation5 + $0x30] sm:$0xf]
    %v92 = vld [vmem:[#allocation5 + $0x34] sm:$0xf]
    %v93 = vld [vmem:[#allocation5 + $0x38] sm:$0xf]
    %v94 = vld [vmem:[#allocation5 + $0x3c] sm:$0xf]
    %v95 = vld [vmem:[%s3] sm:$0x1]
    %v97 = vlaneseq
    %v98 = vshrl.u32 %v97, 7
    %v99 = vsub.s32 0, %v98
    %v100 = vrot.slane %v95, %v99
    %v118 = vunpack.c.l.b16 %v79
    %v119 = vunpack.c.l.b16 %v80
    %v120 = vunpack.c.l.b16 %v81
    %v121 = vunpack.c.l.b16 %v82
    %v122 = vunpack.c.l.b16 %v83
    %v123 = vunpack.c.l.b16 %v84
    %v124 = vunpack.c.l.b16 %v85
    %v125 = vunpack.c.l.b16 %v86
    %v126 = vunpack.c.l.b16 %v87
    %v127 = vunpack.c.l.b16 %v88
    %v128 = vunpack.c.l.b16 %v89
    %v129 = vunpack.c.l.b16 %v90
    %v130 = vunpack.c.l.b16 %v91
    %v131 = vunpack.c.l.b16 %v92
    %v132 = vunpack.c.l.b16 %v93
    %v133 = vunpack.c.l.b16 %v94
    %v134 = vpack.c.b16 %v119, %v118
    %v135 = vpack.c.b16 %v121, %v120
    %v136 = vpack.c.b16 %v123, %v122
    %v137 = vpack.c.b16 %v125, %v124
    %v138 = vpack.c.b16 %v127, %v126
    %v139 = vpack.c.b16 %v129, %v128
    %v140 = vpack.c.b16 %v131, %v130
    %v141 = vpack.c.b16 %v133, %v132
    %150 = vmatprep.subr.bf16.mxu0 0
    %151 = vmatpush1.bf16.msra.mxu0 %v134
    %152 = vmatprep.subr.bf16.mxu0 0
    %153 = vmatpush1.bf16.msra.mxu0 %v135
    %154 = vmatprep.subr.bf16.mxu0 0
    %155 = vmatpush1.bf16.msra.mxu0 %v136
    %156 = vmatprep.subr.bf16.mxu0 0
    %157 = vmatpush1.bf16.msra.mxu0 %v137
    %158 = vmatprep.subr.bf16.mxu0 0
    %159 = vmatpush1.bf16.msra.mxu0 %v138
    %160 = vmatprep.subr.bf16.mxu0 0
    %161 = vmatpush1.bf16.msra.mxu0 %v139
    %162 = vmatprep.subr.bf16.mxu0 0
    %163 = vmatpush1.bf16.msra.mxu0 %v140
    %164 = vmatprep.subr.bf16.mxu0 0
    %165 = vmatpush1.bf16.msra.mxu0 %v141
    %166 = vmatprep.subr.bf16.mxu0 0
    %167 = vmatpush1.bf16.msra.mxu0 0
    %168 = vmatprep.subr.bf16.mxu0 0
    %169 = vmatpush1.bf16.msra.mxu0 0
    %170 = vmatprep.subr.bf16.mxu0 0
    %171 = vmatpush1.bf16.msra.mxu0 0
    %172 = vmatprep.subr.bf16.mxu0 0
    %173 = vmatpush1.bf16.msra.mxu0 0
    %174 = vmatprep.subr.bf16.mxu0 0
    %175 = vmatpush1.bf16.msra.mxu0 0
    %176 = vmatprep.subr.bf16.mxu0 0
    %177 = vmatpush1.bf16.msra.mxu0 0
    %178 = vmatprep.subr.bf16.mxu0 0
    %179 = vmatpush1.bf16.msra.mxu0 0
    %180 = vmatprep.subr.bf16.mxu0 0
    %181 = vmatpush1.bf16.msra.mxu0 0
    %182 = vmatprep.mubr.bf16.mxu0 0
    %183 = vmatmul.mubr.bf16.gmra.mrb[0].mxu0 %v78
    %v184 = vpop.f32.mrb[0].mxu0
    %v185 = vadd.f32 %v100, %v184
    %v186 = vpop.f32.mrb[0].mxu0
    %v187 = vpop.f32.mrb[0].mxu0
    %v188 = vpop.f32.mrb[0].mxu0
    %189 = vdwg.mxu0
    %vm190 = vcmp.gt.f32.partialorder %v185, 0.0
    %v191 = vmul.f32 %v185, 0.2
    %v192 = vsel %vm190, %v185, %v191
    %v193 = vpack.c.bf16 %v192, %v192
    %v194 = vld [vmem:[#allocation7] sm:$0xff]
    %v195 = vld [vmem:[#allocation7 + $0x8] sm:$0xff]
    %v196 = vld [vmem:[#allocation7 + $0x10] sm:$0xff]
    %v197 = vld [vmem:[#allocation7 + $0x18] sm:$0xff]
    %v198 = vld [vmem:[#allocation7 + $0x20] sm:$0xff]
    %v199 = vld [vmem:[#allocation7 + $0x28] sm:$0xff]
    %v200 = vld [vmem:[#allocation7 + $0x30] sm:$0xff]
    %v201 = vld [vmem:[#allocation7 + $0x38] sm:$0xff]
    %v202 = vld [vmem:[#allocation7 + $0x40] sm:$0xff]
    %v203 = vld [vmem:[#allocation7 + $0x48] sm:$0xff]
    %v204 = vld [vmem:[#allocation7 + $0x50] sm:$0xff]
    %v205 = vld [vmem:[#allocation7 + $0x58] sm:$0xff]
    %v206 = vld [vmem:[#allocation7 + $0x60] sm:$0xff]
    %v207 = vld [vmem:[#allocation7 + $0x68] sm:$0xff]
    %v208 = vld [vmem:[#allocation7 + $0x70] sm:$0xff]
    %v209 = vld [vmem:[#allocation7 + $0x78] sm:$0xff]
    %v210 = vld [vmem:[%s5] sm:$0x3]
    %v212 = vlaneseq
    %v213 = vshrl.u32 %v212, 7
    %v214 = vsub.s32 0, %v213
    %v215 = vrot.slane %v210, %v214
    %v216 = vlaneseq
    %v217 = vshrl.u32 %v216, 7
    %v218 = vsub.s32 1, %v217
    %v219 = vrot.slane %v210, %v218
    %v238 = vunpack.c.l.b16 %v194
    %v239 = vunpack.c.h.b16 %v194
    %v240 = vunpack.c.l.b16 %v195
    %v241 = vunpack.c.h.b16 %v195
    %v242 = vunpack.c.l.b16 %v196
    %v243 = vunpack.c.h.b16 %v196
    %v244 = vunpack.c.l.b16 %v197
    %v245 = vunpack.c.h.b16 %v197
    %v246 = vunpack.c.l.b16 %v198
    %v247 = vunpack.c.h.b16 %v198
    %v248 = vunpack.c.l.b16 %v199
    %v249 = vunpack.c.h.b16 %v199
    %v250 = vunpack.c.l.b16 %v200
    %v251 = vunpack.c.h.b16 %v200
    %v252 = vunpack.c.l.b16 %v201
    %v253 = vunpack.c.h.b16 %v201
    %v254 = vunpack.c.l.b16 %v202
    %v255 = vunpack.c.h.b16 %v202
    %v256 = vunpack.c.l.b16 %v203
    %v257 = vunpack.c.h.b16 %v203
    %v258 = vunpack.c.l.b16 %v204
    %v259 = vunpack.c.h.b16 %v204
    %v260 = vunpack.c.l.b16 %v205
    %v261 = vunpack.c.h.b16 %v205
    %v262 = vunpack.c.l.b16 %v206
    %v263 = vunpack.c.h.b16 %v206
    %v264 = vunpack.c.l.b16 %v207
    %v265 = vunpack.c.h.b16 %v207
    %v266 = vunpack.c.l.b16 %v208
    %v267 = vunpack.c.h.b16 %v208
    %v268 = vunpack.c.l.b16 %v209
    %v269 = vunpack.c.h.b16 %v209
    %v270 = vpack.c.b16 %v240, %v238
    %v271 = vpack.c.b16 %v241, %v239
    %v272 = vpack.c.b16 %v244, %v242
    %v273 = vpack.c.b16 %v245, %v243
    %v274 = vpack.c.b16 %v248, %v246
    %v275 = vpack.c.b16 %v249, %v247
    %v276 = vpack.c.b16 %v252, %v250
    %v277 = vpack.c.b16 %v253, %v251
    %v278 = vpack.c.b16 %v256, %v254
    %v279 = vpack.c.b16 %v257, %v255
    %v280 = vpack.c.b16 %v260, %v258
    %v281 = vpack.c.b16 %v261, %v259
    %v282 = vpack.c.b16 %v264, %v262
    %v283 = vpack.c.b16 %v265, %v263
    %v284 = vpack.c.b16 %v268, %v266
    %v285 = vpack.c.b16 %v269, %v267
    %302 = vmatprep.subr.bf16.mxu0 %v271
    %303 = vmatpush1.bf16.msra.mxu0 %v270
    %304 = vmatprep.subr.bf16.mxu0 %v273
    %305 = vmatpush1.bf16.msra.mxu0 %v272
    %306 = vmatprep.subr.bf16.mxu0 %v275
    %307 = vmatpush1.bf16.msra.mxu0 %v274
    %308 = vmatprep.subr.bf16.mxu0 %v277
    %309 = vmatpush1.bf16.msra.mxu0 %v276
    %310 = vmatprep.subr.bf16.mxu0 %v279
    %311 = vmatpush1.bf16.msra.mxu0 %v278
    %312 = vmatprep.subr.bf16.mxu0 %v281
    %313 = vmatpush1.bf16.msra.mxu0 %v280
    %314 = vmatprep.subr.bf16.mxu0 %v283
    %315 = vmatpush1.bf16.msra.mxu0 %v282
    %316 = vmatprep.subr.bf16.mxu0 %v285
    %317 = vmatpush1.bf16.msra.mxu0 %v284
    %318 = vmatprep.subr.bf16.mxu0 0
    %319 = vmatpush1.bf16.msra.mxu0 0
    %320 = vmatprep.subr.bf16.mxu0 0
    %321 = vmatpush1.bf16.msra.mxu0 0
    %322 = vmatprep.subr.bf16.mxu0 0
    %323 = vmatpush1.bf16.msra.mxu0 0
    %324 = vmatprep.subr.bf16.mxu0 0
    %325 = vmatpush1.bf16.msra.mxu0 0
    %326 = vmatprep.subr.bf16.mxu0 0
    %327 = vmatpush1.bf16.msra.mxu0 0
    %328 = vmatprep.subr.bf16.mxu0 0
    %329 = vmatpush1.bf16.msra.mxu0 0
    %330 = vmatprep.subr.bf16.mxu0 0
    %331 = vmatpush1.bf16.msra.mxu0 0
    %332 = vmatprep.subr.bf16.mxu0 0
    %333 = vmatpush1.bf16.msra.mxu0 0
    %334 = vmatprep.mubr.bf16.mxu0 0
    %335 = vmatmul.mubr.bf16.gmra.mrb[0].mxu0 %v193
    %v336 = vpop.f32.mrb[0].mxu0
    %v337 = vadd.f32 %v215, %v336
    %v338 = vpop.f32.mrb[0].mxu0
    %v339 = vadd.f32 %v219, %v338
    %v340 = vpop.f32.mrb[0].mxu0
    %v341 = vpop.f32.mrb[0].mxu0
    %342 = vdwg.mxu0
    %vm343 = vcmp.gt.f32.partialorder %v337, 0.0
    %vm344 = vcmp.gt.f32.partialorder %v339, 0.0
    %v345 = vmul.f32 %v337, 0.2
    %v346 = vmul.f32 %v339, 0.2
    %v347 = vsel %vm343, %v337, %v345
    %v348 = vsel %vm344, %v339, %v346
    %v349 = vpack.c.bf16 %v347, %v347
    %v350 = vpack.c.bf16 %v348, %v348
    %v351 = vld [vmem:[#allocation9] sm:$0xff]
    %v352 = vld [vmem:[#allocation9 + $0x8] sm:$0xff]
    %v353 = vld [vmem:[#allocation9 + $0x10] sm:$0xff]
    %v354 = vld [vmem:[#allocation9 + $0x18] sm:$0xff]
    %v355 = vld [vmem:[#allocation9 + $0x20] sm:$0xff]
    %v356 = vld [vmem:[#allocation9 + $0x28] sm:$0xff]
    %v357 = vld [vmem:[#allocation9 + $0x30] sm:$0xff]
    %v358 = vld [vmem:[#allocation9 + $0x38] sm:$0xff]
    %v359 = vld [vmem:[#allocation9 + $0x40] sm:$0xff]
    %v360 = vld [vmem:[#allocation9 + $0x48] sm:$0xff]
    %v361 = vld [vmem:[#allocation9 + $0x50] sm:$0xff]
    %v362 = vld [vmem:[#allocation9 + $0x58] sm:$0xff]
    %v363 = vld [vmem:[#allocation9 + $0x60] sm:$0xff]
    %v364 = vld [vmem:[#allocation9 + $0x68] sm:$0xff]
    %v365 = vld [vmem:[#allocation9 + $0x70] sm:$0xff]
    %v366 = vld [vmem:[#allocation9 + $0x78] sm:$0xff]
    %v367 = vld [vmem:[#allocation9 + $0x80] sm:$0xff]
    %v368 = vld [vmem:[#allocation9 + $0x88] sm:$0xff]
    %v369 = vld [vmem:[#allocation9 + $0x90] sm:$0xff]
    %v370 = vld [vmem:[#allocation9 + $0x98] sm:$0xff]
    %v371 = vld [vmem:[#allocation9 + $0xa0] sm:$0xff]
    %v372 = vld [vmem:[#allocation9 + $0xa8] sm:$0xff]
    %v373 = vld [vmem:[#allocation9 + $0xb0] sm:$0xff]
    %v374 = vld [vmem:[#allocation9 + $0xb8] sm:$0xff]
    %v375 = vld [vmem:[#allocation9 + $0xc0] sm:$0xff]
    %v376 = vld [vmem:[#allocation9 + $0xc8] sm:$0xff]
    %v377 = vld [vmem:[#allocation9 + $0xd0] sm:$0xff]
    %v378 = vld [vmem:[#allocation9 + $0xd8] sm:$0xff]
    %v379 = vld [vmem:[#allocation9 + $0xe0] sm:$0xff]
    %v380 = vld [vmem:[#allocation9 + $0xe8] sm:$0xff]
    %v381 = vld [vmem:[#allocation9 + $0xf0] sm:$0xff]
    %v382 = vld [vmem:[#allocation9 + $0xf8] sm:$0xff]
    %v383 = vld [vmem:[#allocation9 + $0x100] sm:$0xff]
    %v384 = vld [vmem:[#allocation9 + $0x108] sm:$0xff]
    %v385 = vld [vmem:[#allocation9 + $0x110] sm:$0xff]
    %v386 = vld [vmem:[#allocation9 + $0x118] sm:$0xff]
    %v387 = vld [vmem:[#allocation9 + $0x120] sm:$0xff]
    %v388 = vld [vmem:[#allocation9 + $0x128] sm:$0xff]
    %v389 = vld [vmem:[#allocation9 + $0x130] sm:$0xff]
    %v390 = vld [vmem:[#allocation9 + $0x138] sm:$0xff]
    %v391 = vld [vmem:[#allocation9 + $0x140] sm:$0xff]
    %v392 = vld [vmem:[#allocation9 + $0x148] sm:$0xff]
    %v393 = vld [vmem:[#allocation9 + $0x150] sm:$0xff]
    %v394 = vld [vmem:[#allocation9 + $0x158] sm:$0xff]
    %v395 = vld [vmem:[#allocation9 + $0x160] sm:$0xff]
    %v396 = vld [vmem:[#allocation9 + $0x168] sm:$0xff]
    %v397 = vld [vmem:[#allocation9 + $0x170] sm:$0xff]
    %v398 = vld [vmem:[#allocation9 + $0x178] sm:$0xff]
    %v399 = vld [vmem:[#allocation9 + $0x180] sm:$0xff]
    %v400 = vld [vmem:[#allocation9 + $0x188] sm:$0xff]
    %v401 = vld [vmem:[#allocation9 + $0x190] sm:$0xff]
    %v402 = vld [vmem:[#allocation9 + $0x198] sm:$0xff]
    %v403 = vld [vmem:[#allocation9 + $0x1a0] sm:$0xff]
    %v404 = vld [vmem:[#allocation9 + $0x1a8] sm:$0xff]
    %v405 = vld [vmem:[#allocation9 + $0x1b0] sm:$0xff]
    %v406 = vld [vmem:[#allocation9 + $0x1b8] sm:$0xff]
    %v407 = vld [vmem:[#allocation9 + $0x1c0] sm:$0xff]
    %v408 = vld [vmem:[#allocation9 + $0x1c8] sm:$0xff]
    %v409 = vld [vmem:[#allocation9 + $0x1d0] sm:$0xff]
    %v410 = vld [vmem:[#allocation9 + $0x1d8] sm:$0xff]
    %v411 = vld [vmem:[#allocation9 + $0x1e0] sm:$0xff]
    %v412 = vld [vmem:[#allocation9 + $0x1e8] sm:$0xff]
    %v413 = vld [vmem:[#allocation9 + $0x1f0] sm:$0xff]
    %v414 = vld [vmem:[#allocation9 + $0x1f8] sm:$0xff]
    %v415 = vld [vmem:[%s7] sm:$0xf]
    %v417 = vlaneseq
    %v418 = vshrl.u32 %v417, 7
    %v419 = vsub.s32 0, %v418
    %v420 = vrot.slane %v415, %v419
    %v421 = vlaneseq
    %v422 = vshrl.u32 %v421, 7
    %v423 = vsub.s32 1, %v422
    %v424 = vrot.slane %v415, %v423
    %v425 = vlaneseq
    %v426 = vshrl.u32 %v425, 7
    %v427 = vsub.s32 2, %v426
    %v428 = vrot.slane %v415, %v427
    %v429 = vlaneseq
    %v430 = vshrl.u32 %v429, 7
    %v431 = vsub.s32 3, %v430
    %v432 = vrot.slane %v415, %v431
    %v501 = vunpack.c.l.b16 %v351
    %v502 = vunpack.c.h.b16 %v351
    %v503 = vunpack.c.l.b16 %v352
    %v504 = vunpack.c.h.b16 %v352
    %v505 = vunpack.c.l.b16 %v353
    %v506 = vunpack.c.h.b16 %v353
    %v507 = vunpack.c.l.b16 %v354
    %v508 = vunpack.c.h.b16 %v354
    %v509 = vunpack.c.l.b16 %v355
    %v510 = vunpack.c.h.b16 %v355
    %v511 = vunpack.c.l.b16 %v356
    %v512 = vunpack.c.h.b16 %v356
    %v513 = vunpack.c.l.b16 %v357
    %v514 = vunpack.c.h.b16 %v357
    %v515 = vunpack.c.l.b16 %v358
    %v516 = vunpack.c.h.b16 %v358
    %v517 = vunpack.c.l.b16 %v359
    %v518 = vunpack.c.h.b16 %v359
    %v519 = vunpack.c.l.b16 %v360
    %v520 = vunpack.c.h.b16 %v360
    %v521 = vunpack.c.l.b16 %v361
    %v522 = vunpack.c.h.b16 %v361
    %v523 = vunpack.c.l.b16 %v362
    %v524 = vunpack.c.h.b16 %v362
    %v525 = vunpack.c.l.b16 %v363
    %v526 = vunpack.c.h.b16 %v363
    %v527 = vunpack.c.l.b16 %v364
    %v528 = vunpack.c.h.b16 %v364
    %v529 = vunpack.c.l.b16 %v365
    %v530 = vunpack.c.h.b16 %v365
    %v531 = vunpack.c.l.b16 %v366
    %v532 = vunpack.c.h.b16 %v366
    %v533 = vunpack.c.l.b16 %v367
    %v534 = vunpack.c.h.b16 %v367
    %v535 = vunpack.c.l.b16 %v368
    %v536 = vunpack.c.h.b16 %v368
    %v537 = vunpack.c.l.b16 %v369
    %v538 = vunpack.c.h.b16 %v369
    %v539 = vunpack.c.l.b16 %v370
    %v540 = vunpack.c.h.b16 %v370
    %v541 = vunpack.c.l.b16 %v371
    %v542 = vunpack.c.h.b16 %v371
    %v543 = vunpack.c.l.b16 %v372
    %v544 = vunpack.c.h.b16 %v372
    %v545 = vunpack.c.l.b16 %v373
    %v546 = vunpack.c.h.b16 %v373
    %v547 = vunpack.c.l.b16 %v374
    %v548 = vunpack.c.h.b16 %v374
    %v549 = vunpack.c.l.b16 %v375
    %v550 = vunpack.c.h.b16 %v375
    %v551 = vunpack.c.l.b16 %v376
    %v552 = vunpack.c.h.b16 %v376
    %v553 = vunpack.c.l.b16 %v377
    %v554 = vunpack.c.h.b16 %v377
    %v555 = vunpack.c.l.b16 %v378
    %v556 = vunpack.c.h.b16 %v378
    %v557 = vunpack.c.l.b16 %v379
    %v558 = vunpack.c.h.b16 %v379
    %v559 = vunpack.c.l.b16 %v380
    %v560 = vunpack.c.h.b16 %v380
    %v561 = vunpack.c.l.b16 %v381
    %v562 = vunpack.c.h.b16 %v381
    %v563 = vunpack.c.l.b16 %v382
    %v564 = vunpack.c.h.b16 %v382
    %v565 = vunpack.c.l.b16 %v383
    %v566 = vunpack.c.h.b16 %v383
    %v567 = vunpack.c.l.b16 %v384
    %v568 = vunpack.c.h.b16 %v384
    %v569 = vunpack.c.l.b16 %v385
    %v570 = vunpack.c.h.b16 %v385
    %v571 = vunpack.c.l.b16 %v386
    %v572 = vunpack.c.h.b16 %v386
    %v573 = vunpack.c.l.b16 %v387
    %v574 = vunpack.c.h.b16 %v387
    %v575 = vunpack.c.l.b16 %v388
    %v576 = vunpack.c.h.b16 %v388
    %v577 = vunpack.c.l.b16 %v389
    %v578 = vunpack.c.h.b16 %v389
    %v579 = vunpack.c.l.b16 %v390
    %v580 = vunpack.c.h.b16 %v390
    %v581 = vunpack.c.l.b16 %v391
    %v582 = vunpack.c.h.b16 %v391
    %v583 = vunpack.c.l.b16 %v392
    %v584 = vunpack.c.h.b16 %v392
    %v585 = vunpack.c.l.b16 %v393
    %v586 = vunpack.c.h.b16 %v393
    %v587 = vunpack.c.l.b16 %v394
    %v588 = vunpack.c.h.b16 %v394
    %v589 = vunpack.c.l.b16 %v395
    %v590 = vunpack.c.h.b16 %v395
    %v591 = vunpack.c.l.b16 %v396
    %v592 = vunpack.c.h.b16 %v396
    %v593 = vunpack.c.l.b16 %v397
    %v594 = vunpack.c.h.b16 %v397
    %v595 = vunpack.c.l.b16 %v398
    %v596 = vunpack.c.h.b16 %v398
    %v597 = vunpack.c.l.b16 %v399
    %v598 = vunpack.c.h.b16 %v399
    %v599 = vunpack.c.l.b16 %v400
    %v600 = vunpack.c.h.b16 %v400
    %v601 = vunpack.c.l.b16 %v401
    %v602 = vunpack.c.h.b16 %v401
    %v603 = vunpack.c.l.b16 %v402
    %v604 = vunpack.c.h.b16 %v402
    %v605 = vunpack.c.l.b16 %v403
    %v606 = vunpack.c.h.b16 %v403
    %v607 = vunpack.c.l.b16 %v404
    %v608 = vunpack.c.h.b16 %v404
    %v609 = vunpack.c.l.b16 %v405
    %v610 = vunpack.c.h.b16 %v405
    %v611 = vunpack.c.l.b16 %v406
    %v612 = vunpack.c.h.b16 %v406
    %v613 = vunpack.c.l.b16 %v407
    %v614 = vunpack.c.h.b16 %v407
    %v615 = vunpack.c.l.b16 %v408
    %v616 = vunpack.c.h.b16 %v408
    %v617 = vunpack.c.l.b16 %v409
    %v618 = vunpack.c.h.b16 %v409
    %v619 = vunpack.c.l.b16 %v410
    %v620 = vunpack.c.h.b16 %v410
    %v621 = vunpack.c.l.b16 %v411
    %v622 = vunpack.c.h.b16 %v411
    %v623 = vunpack.c.l.b16 %v412
    %v624 = vunpack.c.h.b16 %v412
    %v625 = vunpack.c.l.b16 %v413
    %v626 = vunpack.c.h.b16 %v413
    %v627 = vunpack.c.l.b16 %v414
    %v628 = vunpack.c.h.b16 %v414
    %v629 = vpack.c.b16 %v505, %v501
    %v630 = vpack.c.b16 %v506, %v502
    %v631 = vpack.c.b16 %v507, %v503
    %v632 = vpack.c.b16 %v508, %v504
    %v633 = vpack.c.b16 %v513, %v509
    %v634 = vpack.c.b16 %v514, %v510
    %v635 = vpack.c.b16 %v515, %v511
    %v636 = vpack.c.b16 %v516, %v512
    %v637 = vpack.c.b16 %v521, %v517
    %v638 = vpack.c.b16 %v522, %v518
    %v639 = vpack.c.b16 %v523, %v519
    %v640 = vpack.c.b16 %v524, %v520
    %v641 = vpack.c.b16 %v529, %v525
    %v642 = vpack.c.b16 %v530, %v526
    %v643 = vpack.c.b16 %v531, %v527
    %v644 = vpack.c.b16 %v532, %v528
    %v645 = vpack.c.b16 %v537, %v533
    %v646 = vpack.c.b16 %v538, %v534
    %v647 = vpack.c.b16 %v539, %v535
    %v648 = vpack.c.b16 %v540, %v536
    %v649 = vpack.c.b16 %v545, %v541
    %v650 = vpack.c.b16 %v546, %v542
    %v651 = vpack.c.b16 %v547, %v543
    %v652 = vpack.c.b16 %v548, %v544
    %v653 = vpack.c.b16 %v553, %v549
    %v654 = vpack.c.b16 %v554, %v550
    %v655 = vpack.c.b16 %v555, %v551
    %v656 = vpack.c.b16 %v556, %v552
    %v657 = vpack.c.b16 %v561, %v557
    %v658 = vpack.c.b16 %v562, %v558
    %v659 = vpack.c.b16 %v563, %v559
    %v660 = vpack.c.b16 %v564, %v560
    %v661 = vpack.c.b16 %v569, %v565
    %v662 = vpack.c.b16 %v570, %v566
    %v663 = vpack.c.b16 %v571, %v567
    %v664 = vpack.c.b16 %v572, %v568
    %v665 = vpack.c.b16 %v577, %v573
    %v666 = vpack.c.b16 %v578, %v574
    %v667 = vpack.c.b16 %v579, %v575
    %v668 = vpack.c.b16 %v580, %v576
    %v669 = vpack.c.b16 %v585, %v581
    %v670 = vpack.c.b16 %v586, %v582
    %v671 = vpack.c.b16 %v587, %v583
    %v672 = vpack.c.b16 %v588, %v584
    %v673 = vpack.c.b16 %v593, %v589
    %v674 = vpack.c.b16 %v594, %v590
    %v675 = vpack.c.b16 %v595, %v591
    %v676 = vpack.c.b16 %v596, %v592
    %v677 = vpack.c.b16 %v601, %v597
    %v678 = vpack.c.b16 %v602, %v598
    %v679 = vpack.c.b16 %v603, %v599
    %v680 = vpack.c.b16 %v604, %v600
    %v681 = vpack.c.b16 %v609, %v605
    %v682 = vpack.c.b16 %v610, %v606
    %v683 = vpack.c.b16 %v611, %v607
    %v684 = vpack.c.b16 %v612, %v608
    %v685 = vpack.c.b16 %v617, %v613
    %v686 = vpack.c.b16 %v618, %v614
    %v687 = vpack.c.b16 %v619, %v615
    %v688 = vpack.c.b16 %v620, %v616
    %v689 = vpack.c.b16 %v625, %v621
    %v690 = vpack.c.b16 %v626, %v622
    %v691 = vpack.c.b16 %v627, %v623
    %v692 = vpack.c.b16 %v628, %v624
    %757 = vmatprep.subr.bf16.mxu0 %v630
    %758 = vmatpush1.bf16.msra.mxu0 %v629
    %759 = vmatprep.subr.bf16.mxu0 %v634
    %760 = vmatpush1.bf16.msra.mxu0 %v633
    %761 = vmatprep.subr.bf16.mxu0 %v638
    %762 = vmatpush1.bf16.msra.mxu0 %v637
    %763 = vmatprep.subr.bf16.mxu0 %v642
    %764 = vmatpush1.bf16.msra.mxu0 %v641
    %765 = vmatprep.subr.bf16.mxu0 %v646
    %766 = vmatpush1.bf16.msra.mxu0 %v645
    %767 = vmatprep.subr.bf16.mxu0 %v650
    %768 = vmatpush1.bf16.msra.mxu0 %v649
    %769 = vmatprep.subr.bf16.mxu0 %v654
    %770 = vmatpush1.bf16.msra.mxu0 %v653
    %771 = vmatprep.subr.bf16.mxu0 %v658
    %772 = vmatpush1.bf16.msra.mxu0 %v657
    %773 = vmatprep.subr.bf16.mxu0 %v662
    %774 = vmatpush1.bf16.msra.mxu0 %v661
    %775 = vmatprep.subr.bf16.mxu0 %v666
    %776 = vmatpush1.bf16.msra.mxu0 %v665
    %777 = vmatprep.subr.bf16.mxu0 %v670
    %778 = vmatpush1.bf16.msra.mxu0 %v669
    %779 = vmatprep.subr.bf16.mxu0 %v674
    %780 = vmatpush1.bf16.msra.mxu0 %v673
    %781 = vmatprep.subr.bf16.mxu0 %v678
    %782 = vmatpush1.bf16.msra.mxu0 %v677
    %783 = vmatprep.subr.bf16.mxu0 %v682
    %784 = vmatpush1.bf16.msra.mxu0 %v681
    %785 = vmatprep.subr.bf16.mxu0 %v686
    %786 = vmatpush1.bf16.msra.mxu0 %v685
    %787 = vmatprep.subr.bf16.mxu0 %v690
    %788 = vmatpush1.bf16.msra.mxu0 %v689
    %789 = vmatprep.mubr.bf16.mxu0 %v350
    %790 = vmatmul.mubr.bf16.gmra.mrb[0].mxu0 %v349
    %v791 = vpop.f32.mrb[0].mxu0
    %v792 = vadd.f32 %v420, %v791
    %v793 = vpop.f32.mrb[0].mxu0
    %v794 = vadd.f32 %v424, %v793
    %v795 = vpop.f32.mrb[0].mxu0
    %v796 = vpop.f32.mrb[0].mxu0
    %797 = vdwg.mxu0
    %798 = vmatprep.subr.bf16.mxu0 %v632
    %799 = vmatpush1.bf16.msra.mxu0 %v631
    %800 = vmatprep.subr.bf16.mxu0 %v636
    %801 = vmatpush1.bf16.msra.mxu0 %v635
    %802 = vmatprep.subr.bf16.mxu0 %v640
    %803 = vmatpush1.bf16.msra.mxu0 %v639
    %804 = vmatprep.subr.bf16.mxu0 %v644
    %805 = vmatpush1.bf16.msra.mxu0 %v643
    %806 = vmatprep.subr.bf16.mxu0 %v648
    %807 = vmatpush1.bf16.msra.mxu0 %v647
    %808 = vmatprep.subr.bf16.mxu0 %v652
    %809 = vmatpush1.bf16.msra.mxu0 %v651
    %810 = vmatprep.subr.bf16.mxu0 %v656
    %811 = vmatpush1.bf16.msra.mxu0 %v655
    %812 = vmatprep.subr.bf16.mxu0 %v660
    %813 = vmatpush1.bf16.msra.mxu0 %v659
    %814 = vmatprep.subr.bf16.mxu0 %v664
    %815 = vmatpush1.bf16.msra.mxu0 %v663
    %816 = vmatprep.subr.bf16.mxu0 %v668
    %817 = vmatpush1.bf16.msra.mxu0 %v667
    %818 = vmatprep.subr.bf16.mxu0 %v672
    %819 = vmatpush1.bf16.msra.mxu0 %v671
    %820 = vmatprep.subr.bf16.mxu0 %v676
    %821 = vmatpush1.bf16.msra.mxu0 %v675
    %822 = vmatprep.subr.bf16.mxu0 %v680
    %823 = vmatpush1.bf16.msra.mxu0 %v679
    %824 = vmatprep.subr.bf16.mxu0 %v684
    %825 = vmatpush1.bf16.msra.mxu0 %v683
    %826 = vmatprep.subr.bf16.mxu0 %v688
    %827 = vmatpush1.bf16.msra.mxu0 %v687
    %828 = vmatprep.subr.bf16.mxu0 %v692
    %829 = vmatpush1.bf16.msra.mxu0 %v691
    %830 = vmatprep.mubr.bf16.mxu0 %v350
    %831 = vmatmul.mubr.bf16.gmra.mrb[0].mxu0 %v349
    %v832 = vpop.f32.mrb[0].mxu0
    %v833 = vadd.f32 %v428, %v832
    %v834 = vpop.f32.mrb[0].mxu0
    %v835 = vadd.f32 %v432, %v834
    %v836 = vpop.f32.mrb[0].mxu0
    %v837 = vpop.f32.mrb[0].mxu0
    %838 = vdwg.mxu0
    %vm839 = vcmp.gt.f32.partialorder %v792, 0.0
    %vm840 = vcmp.gt.f32.partialorder %v794, 0.0
    %vm841 = vcmp.gt.f32.partialorder %v833, 0.0
    %vm842 = vcmp.gt.f32.partialorder %v835, 0.0
    %v843 = vmul.f32 %v792, 0.2
    %v844 = vmul.f32 %v794, 0.2
    %v845 = vmul.f32 %v833, 0.2
    %v846 = vmul.f32 %v835, 0.2
    %v847 = vsel %vm839, %v792, %v843
    %v848 = vsel %vm840, %v794, %v844
    %v849 = vsel %vm841, %v833, %v845
    %v850 = vsel %vm842, %v835, %v846
    %v851 = vld [vmem:[%s8] sm:$0xf]
    %v853 = vlaneseq
    %v854 = vshrl.u32 %v853, 7
    %v855 = vsub.s32 0, %v854
    %v856 = vrot.slane %v851, %v855
    %v857 = vlaneseq
    %v858 = vshrl.u32 %v857, 7
    %v859 = vsub.s32 1, %v858
    %v860 = vrot.slane %v851, %v859
    %v861 = vlaneseq
    %v862 = vshrl.u32 %v861, 7
    %v863 = vsub.s32 2, %v862
    %v864 = vrot.slane %v851, %v863
    %v865 = vlaneseq
    %v866 = vshrl.u32 %v865, 7
    %v867 = vsub.s32 3, %v866
    %v868 = vrot.slane %v851, %v867
    %v873 = vmul.f32 %v847, %v856
    %v874 = vmul.f32 %v848, %v860
    %v875 = vmul.f32 %v849, %v864
    %v876 = vmul.f32 %v850, %v868
    %v877 = vadd.f32 %v873, %v874
    %v878 = vadd.f32 %v877, %v875
    %v879 = vadd.f32 %v878, %v876
    %880 = vadd.xlane.f32.xlu0 %v879
    %v881 = vpop.xlane.xlu0 %880
    %v882 = vld [vmem:[#allocation4] sm:$0x1]
    %v884 = vlaneseq
    %v885 = vshrl.u32 %v884, 7
    %v886 = vsub.s32 0, %v885
    %v887 = vrot.slane %v882, %v886
    %v889 = vadd.f32 %v881, %v887
    %v890 = vxor.u32 %v889, 2147483648
    %v891 = vmul.f32 %v890, 1.442695
    %v892 = vpow.pop %v891
    %v893 = vadd.f32 %v892, 1.0
    %v894 = vrcp.pop %v893
    %v895 = vmul.f32 1.0, %v894
    %vm896 = vcmask 7168
    %897 = vst.msk [vmem:[%s10] sm:$0xff] %vm896, %v895
    // Predicated region
    $region50: #{tpu_custom_call.1} parent=1 // pred_check
      _
    $region51: #{tpu_custom_call.1} parent=1 // pred_check_branch
      %899 = sbr.rel (0) target = $region53
    $region52: #{tpu_custom_call.1} parent=1 // pred_region
      _
    $region53: #{tpu_custom_call.1} parent=1 // pred_fallthru
      _
    // Predicated region
    $region54: #{tpu_custom_call.1} parent=1 // pred_check
      _
    $region55: #{tpu_custom_call.1} parent=1 // pred_check_branch
      %901 = sbr.rel (0) target = $region57
    $region56: #{tpu_custom_call.1} parent=1 // pred_region
      _
    $region57: #{tpu_custom_call.1} parent=1 // pred_fallthru
      _
    %902 = vsyncpa [#allocation6], 1
    %903 = vsyncpa [#allocation8], 1

</llo_original>
